<compile_context>
chip_gen: v7x
topology: tpu7x:2x2x1
jax: 0.10.0
libtpu: 0.0.40
codegen_flags: <defaults>
</compile_context>

<pallas_src>
import jax
import jax.numpy as jnp
from jax.experimental import pallas as pl
from jax.experimental.pallas import tpu as pltpu


def _round_up(x, m):
    return (x + m - 1) // m * m


def _vmem_capacity_bytes():
    """Physical VMEM per TensorCore; conservative fallback if the query is unavailable."""
    try:
        return int(pltpu.get_tpu_info().vmem_capacity_bytes)
    except Exception:
        return 64 * 1024 * 1024  # v7x per-TC capacity: safe lower bound everywhere


def _linear_layer_kernel(x_ref, w1_ref, b1_ref, w2_ref, b2_ref, o_ref):
    # x:  (TM, Dp)   w1/w2: (Dp, Dp) pre-transposed (d_in, d_out)   b1/b2: (1, Dp)
    x = x_ref[...]

    # dropout (eval mode) == identity

    # first linear: h = x @ W1 + b1   (f32 accumulation on the MXU)
    h = jnp.dot(x, w1_ref[...], preferred_element_type=jnp.float32) + b1_ref[...]
    h = h.astype(x.dtype)  # stage intermediate in input dtype (bf16 if inputs are bf16)

    # second linear: y = h @ W2 + b2
    y = jnp.dot(h, w2_ref[...], preferred_element_type=jnp.float32) + b2_ref[...]

    o_ref[...] = y.astype(o_ref.dtype)


def linear_layer_forward(x, w1, b1, w2, b2, *, block_m=512):
    """x: (batch, *) -> flattened to (batch, d_model); returns (batch, d_model).

    Weights are stored pre-transposed as (d_in, d_out): y = x @ W + b
    (equivalent to PyTorch's x @ W_pt.T + b).
    """
    batch = x.shape[0]
    x2d = x.reshape(batch, -1)                       # x.view(batch_size, -1)
    d_model = x2d.shape[-1]
    assert w1.shape == (d_model, d_model)
    assert w2.shape == (d_model, d_model)

    out_dtype = x2d.dtype
    compute_dtype = x2d.dtype

    # Stage weights/biases in the activation dtype (bf16 weights for bf16 activations ->
    # half the weight VMEM residency + DMA bytes, bf16 MXU fast path). Accumulation stays
    # f32 inside the kernel; this matches mixed-precision practice but will differ
    # slightly from an all-f32 reference when activations are bf16.
    if w1.dtype != compute_dtype:
        w1 = w1.astype(compute_dtype)
        w2 = w2.astype(compute_dtype)
        b1 = b1.astype(compute_dtype)
        b2 = b2.astype(compute_dtype)

    # Lane-dense padding: features -> multiple of 128 lanes; batch -> multiple of 8
    # sublanes. Padded columns / bias entries are zero.
    dp = _round_up(d_model, 128)
    b8 = _round_up(batch, 8)

    # Tile the batch: enough tiles to (a) keep each tile <= block_m and (b) give the
    # "parallel" axis at least 2 steps when the batch allows (v7x dual-TC sharding and
    # DMA/compute overlap on every generation). Size the tile from the batch so padding
    # waste stays below one tile.
    n_tiles = max(pl.cdiv(b8, block_m), 2 if b8 >= 16 else 1)
    tm = _round_up(pl.cdiv(b8, n_tiles), 8)
    grid_m = pl.cdiv(b8, tm)
    bp = grid_m * tm

    if dp != d_model:
        w1 = jnp.pad(w1, ((0, dp - d_model), (0, dp - d_model)))
        w2 = jnp.pad(w2, ((0, dp - d_model), (0, dp - d_model)))
        b1 = jnp.pad(b1, (0, dp - d_model))
        b2 = jnp.pad(b2, (0, dp - d_model))
    if dp != d_model or bp != batch:
        x2d = jnp.pad(x2d, ((0, bp - batch), (0, dp - d_model)))

    b1_2d = b1.reshape(1, dp)
    b2_2d = b2.reshape(1, dp)

    # VMEM budget (weights single-buffered via Buffered(1); x/out double-buffered).
    w_bytes = jnp.dtype(compute_dtype).itemsize
    o_bytes = jnp.dtype(out_dtype).itemsize
    weight_resident = 2 * dp * dp * w_bytes + 2 * dp * w_bytes      # W1+W2+b1+b2, 1 buffer each
    est = (weight_resident
           + 2 * tm * dp * w_bytes        # x tile, double-buffered
           + 2 * tm * dp * o_bytes        # out tile, double-buffered
           + 2 * tm * dp * 4)             # f32 intermediates (headroom)
    cap = _vmem_capacity_bytes()
    if weight_resident > cap - (8 << 20):
        # TODO(synk): fall back to an N/K-tiled accumulator path instead of failing.
        raise NotImplementedError(
            f"d_model={d_model} exceeds the weight-resident VMEM ceiling ({cap>>20} MiB)")
    vmem_limit = int(min(max(est + (8 << 20), 32 << 20), cap - (4 << 20)))

    out_padded = pl.pallas_call(
        _linear_layer_kernel,
        out_shape=jax.ShapeDtypeStruct((bp, dp), out_dtype),
        grid=(grid_m,),
        in_specs=[
            # x tile moves with the grid (double-buffered by default -> DMA overlap).
            pl.BlockSpec((tm, dp), lambda i: (i, 0)),
            # Constant-index operands: single-buffered, VMEM-resident across all tiles.
            pl.BlockSpec((dp, dp), lambda i: (0, 0), pipeline_mode=pl.Buffered(1)),  # W1
            pl.BlockSpec((1, dp), lambda i: (0, 0), pipeline_mode=pl.Buffered(1)),   # b1
            pl.BlockSpec((dp, dp), lambda i: (0, 0), pipeline_mode=pl.Buffered(1)),  # W2
            pl.BlockSpec((1, dp), lambda i: (0, 0), pipeline_mode=pl.Buffered(1)),   # b2
        ],
        out_specs=pl.BlockSpec((tm, dp), lambda i: (i, 0)),
        compiler_params=pltpu.CompilerParams(
            dimension_semantics=("parallel",),   # shard batch tiles across TCs (v7x)
            vmem_limit_bytes=vmem_limit,
        ),
    )(x2d, w1, b1_2d, w2, b2_2d)

    return out_padded[:batch, :d_model]


def init_params(key, d_model, dtype=jnp.float32):
    """Deterministic init mimicking nn.Linear's uniform(-1/sqrt(d), 1/sqrt(d)).
    Weights are returned pre-transposed as (d_in, d_out)."""
    k1, k2, k3, k4 = jax.random.split(key, 4)
    bound = 1.0 / jnp.sqrt(d_model)
    w1 = jax.random.uniform(k1, (d_model, d_model), dtype, -bound, bound)
    b1 = jax.random.uniform(k2, (d_model,), dtype, -bound, bound)
    w2 = jax.random.uniform(k3, (d_model, d_model), dtype, -bound, bound)
    b2 = jax.random.uniform(k4, (d_model,), dtype, -bound, bound)
    return w1, b1, w2, b2


if __name__ == "__main__":
    key = jax.random.PRNGKey(0)
    k_x, k_p = jax.random.split(key)

    # x of shape (batch, C, S) is flattened by the layer -> d_model = C*S = 32.
    batch, c, s = 16, 4, 8
    d_model = c * s
    x = jax.random.normal(k_x, (batch, c, s), dtype=jnp.float32)
    w1, b1, w2, b2 = init_params(k_p, d_model)

    out = linear_layer_forward(x, w1, b1, w2, b2)
    out = jax.block_until_ready(out)

    # Reference check in plain JAX (dropout in eval mode == identity).
    x2d = x.reshape(batch, -1)
    ref = (x2d @ w1 + b1) @ w2 + b2
    assert out.shape == (batch, d_model)
    assert jnp.allclose(out, ref, atol=1e-5, rtol=1e-5)

    print("KERNEL_OK")
</pallas_src>

<mosaic_0001>
module attributes {stable_mosaic.version = 11 : i64} {
  func.func @_linear_layer_kernel(%arg0: i32, %arg1: memref<8x128xf32, #tpu.memory_space<vmem>>, %arg2: memref<128x128xf32, #tpu.memory_space<vmem>>, %arg3: memref<1x128xf32, #tpu.memory_space<vmem>>, %arg4: memref<128x128xf32, #tpu.memory_space<vmem>>, %arg5: memref<1x128xf32, #tpu.memory_space<vmem>>, %arg6: memref<8x128xf32, #tpu.memory_space<vmem>>) attributes {dimension_semantics = [#tpu.dimension_semantics<parallel>], iteration_bounds = array<i64: 2>, scalar_prefetch = 0 : i64, scratch_operands = 0 : i64, tpu.core_type = #tpu.core_type<tc>, window_params = [{transform_indices = @transform_0, window_bounds = array<i64: 8, 128>}, {pipeline_mode = #tpu.pipeline_mode<synchronous>, transform_indices = @transform_1, window_bounds = array<i64: 128, 128>}, {pipeline_mode = #tpu.pipeline_mode<synchronous>, transform_indices = @transform_2, window_bounds = array<i64: 1, 128>}, {pipeline_mode = #tpu.pipeline_mode<synchronous>, transform_indices = @transform_3, window_bounds = array<i64: 128, 128>}, {pipeline_mode = #tpu.pipeline_mode<synchronous>, transform_indices = @transform_4, window_bounds = array<i64: 1, 128>}, {transform_indices = @transform_5, window_bounds = array<i64: 8, 128>}]} {
    %c0 = arith.constant 0 : index
    %c0_0 = arith.constant 0 : index
    %0 = vector.load %arg1[%c0, %c0_0] : memref<8x128xf32, #tpu.memory_space<vmem>>, vector<8x128xf32>
    %c0_1 = arith.constant 0 : index
    %c0_2 = arith.constant 0 : index
    %1 = vector.load %arg2[%c0_1, %c0_2] : memref<128x128xf32, #tpu.memory_space<vmem>>, vector<128x128xf32>
    %cst = arith.constant dense<0.000000e+00> : vector<8x128xf32>
    %2 = tpu.matmul %0, %1, %cst {dimension_numbers = #tpu.dot_dimension_numbers<[1], [0], [0], [1], [0, 0, 1, 1], [], []>} : vector<8x128xf32>, vector<128x128xf32>, vector<8x128xf32> -> vector<8x128xf32>
    %c0_3 = arith.constant 0 : index
    %c0_4 = arith.constant 0 : index
    %3 = vector.load %arg3[%c0_3, %c0_4] : memref<1x128xf32, #tpu.memory_space<vmem>>, vector<1x128xf32>
    %4 = vector.broadcast %3 : vector<1x128xf32> to vector<8x128xf32>
    %5 = arith.addf %2, %4 : vector<8x128xf32>
    %c0_5 = arith.constant 0 : index
    %c0_6 = arith.constant 0 : index
    %6 = vector.load %arg4[%c0_5, %c0_6] : memref<128x128xf32, #tpu.memory_space<vmem>>, vector<128x128xf32>
    %cst_7 = arith.constant dense<0.000000e+00> : vector<8x128xf32>
    %7 = tpu.matmul %5, %6, %cst_7 {dimension_numbers = #tpu.dot_dimension_numbers<[1], [0], [0], [1], [0, 0, 1, 1], [], []>} : vector<8x128xf32>, vector<128x128xf32>, vector<8x128xf32> -> vector<8x128xf32>
    %c0_8 = arith.constant 0 : index
    %c0_9 = arith.constant 0 : index
    %8 = vector.load %arg5[%c0_8, %c0_9] : memref<1x128xf32, #tpu.memory_space<vmem>>, vector<1x128xf32>
    %9 = vector.broadcast %8 : vector<1x128xf32> to vector<8x128xf32>
    %10 = arith.addf %7, %9 : vector<8x128xf32>
    %c0_10 = arith.constant 0 : index
    %c0_11 = arith.constant 0 : index
    %11 = vector.load %arg6[%c0_10, %c0_11] : memref<8x128xf32, #tpu.memory_space<vmem>>, vector<8x128xf32>
    tpu.vector_store %arg6[%c0_10, %c0_11], %10 {strides = array<i32>} : memref<8x128xf32, #tpu.memory_space<vmem>>, vector<8x128xf32>,
    return
  }
  func.func @transform_0(%arg0: i32) -> (i32, i32) {
    %c0_i32 = arith.constant 0 : i32
    %c0_i32_0 = arith.constant 0 : i32
    return %arg0, %c0_i32 : i32, i32
  }
  func.func @transform_1(%arg0: i32) -> (i32, i32) {
    %c0_i32 = arith.constant 0 : i32
    %c0_i32_0 = arith.constant 0 : i32
    %c0_i32_1 = arith.constant 0 : i32
    return %c0_i32, %c0_i32_0 : i32, i32
  }
  func.func @transform_2(%arg0: i32) -> (i32, i32) {
    %c0_i32 = arith.constant 0 : i32
    %c0_i32_0 = arith.constant 0 : i32
    %c0_i32_1 = arith.constant 0 : i32
    return %c0_i32, %c0_i32_0 : i32, i32
  }
  func.func @transform_3(%arg0: i32) -> (i32, i32) {
    %c0_i32 = arith.constant 0 : i32
    %c0_i32_0 = arith.constant 0 : i32
    %c0_i32_1 = arith.constant 0 : i32
    return %c0_i32, %c0_i32_0 : i32, i32
  }
  func.func @transform_4(%arg0: i32) -> (i32, i32) {
    %c0_i32 = arith.constant 0 : i32
    %c0_i32_0 = arith.constant 0 : i32
    %c0_i32_1 = arith.constant 0 : i32
    return %c0_i32, %c0_i32_0 : i32, i32
  }
  func.func @transform_5(%arg0: i32) -> (i32, i32) {
    %c0_i32 = arith.constant 0 : i32
    %c0_i32_0 = arith.constant 0 : i32
    return %arg0, %c0_i32 : i32, i32
  }
}

</mosaic_0001>

<llo_original>
// kernel: tpu_custom_call.1
$region0: #{tpu_custom_call.1}
  #allocation0 [shape = 'u32[]', space=smem, size = 0x4, offset = 0x4, fixed_abs, tag = 'smem constant byte address 0x4 - core index']
  #allocation1 [shape = 'u32[144,128]{1,0:T(1,128)}', space=vmem, size = 0x12000, scoped, tag = 'internal scratch']
  %s0 = inlined_call_operand.hbm [shape: f32[16,128], index: 0, kind: input, shape index: {}]
  %s1 = inlined_call_operand.hbm [shape: f32[128,128], index: 1, kind: input, shape index: {}]
  %s2 = inlined_call_operand.vmem [shape: f32[1,128], index: 2, kind: input, shape index: {}]
  %s3 = inlined_call_operand.hbm [shape: f32[128,128], index: 3, kind: input, shape index: {}]
  %s4 = inlined_call_operand.vmem [shape: f32[1,128], index: 4, kind: input, shape index: {}]
  %s5 = inlined_call_operand.hbm [shape: f32[16,128], index: 5, kind: output, shape index: {}]
  %s6 = sld [smem:[#allocation0]]
  $region65: #{tpu_custom_call.1} parent=0
    _
  %s8 = ssub.s32 1, %s6
  %s9 = scalar_select 0, %s8, %s6
  $region1: #{tpu_custom_call.1} parent=0
    #allocation2 [shape = 'u8[8192]{0}', space=vmem, size = 0x2000, scoped, tag = 'input window, operand 0']
    #allocation3 [shape = 's32[2]{0}', space=sflag, size = 0x8, scoped, tag = 'scoped memory for tpu_custom_call.1']
    #allocation4 [shape = 's32[2]{0}', space=sflag, size = 0x8, scoped, tag = 'scoped memory for tpu_custom_call.1']
    #allocation5 [shape = 'u8[65536]{0}', space=vmem, size = 0x10000, scoped, tag = 'input window, operand 1, single buffered']
    #allocation6 [shape = 's32[1]{0}', space=sflag, size = 0x4, scoped, tag = 'scoped memory for tpu_custom_call.1']
    #allocation7 [shape = 'u8[65536]{0}', space=vmem, size = 0x10000, scoped, tag = 'input window, operand 3, single buffered']
    #allocation8 [shape = 'u8[8192]{0}', space=vmem, size = 0x2000, scoped, tag = 'output window, operand 0']
    %10 = vsyncpa [#allocation3], 0
    %s11 = scalar_lea.sflag [#allocation3], 1
    %12 = vsyncpa %s11, 0
    %13 = vsyncpa [#allocation6], 0
    %14 = vsyncpa [#allocation4], 0
    %s15 = scalar_lea.sflag [#allocation4], 1
    %16 = vsyncpa %s15, 0
    loop: start=0, step=1, limit=4
    $region2: #{tpu_custom_call.1} parent=1 // loop_pre_header
      _
    $region3: #{tpu_custom_call.1} parent=1 // loop_header
      %s18 = sphi 0, %s22
      %p19 = scmp.ge.s32.totalorder %s18, 4
      %s28 = sphi 0, %s30
      %s31 = sphi 0, %s28
      %s32 = sphi 0, %s31
      %s48 = sphi 0, %s32
      %s52 = sphi 0, %s52
      %s54 = sphi 0, %s52
      %s55 = sphi 0, %s54
      %s69 = sphi 0, %s55
      %s73 = sphi 0, %s73
      %s75 = sphi 0, %s73
      %s76 = sphi 0, %s75
      %s90 = sphi 0, %s76
      %s94 = sphi 0, %s94
      %s96 = sphi 0, %s94
      %s97 = sphi 0, %s96
      %s111 = sphi 0, %s97
      %s115 = sphi 0, %s115
      %s117 = sphi 0, %s115
      %s118 = sphi 0, %s117
      %s132 = sphi 0, %s118
      %s138 = sphi 0, %s140
      %s141 = sphi 0, %s138
      %s142 = sphi 0, %s141
      %s158 = sphi 0, %s142
    $region4: #{tpu_custom_call.1} parent=1 // loop_header_branch
      %21 = sbr.rel (%p19) target = $region8
    $region5: #{tpu_custom_call.1} parent=1 // loop_body
      %s23 = ssub.s32 %s18, 1
      %s24 = ssub.s32 %s18, 2
      %s25 = sadd.s32 %s18, 1
      %s26 = ssub.s32 %s18, %s25
      %p27 = scmp.eq.s32.totalorder %s26, 0
      %s29 = sadd.s32 %s28, 1
      %s30 = scalar_select %p27, %s28, %s29
      %p33 = pneg %p27
      %p34 = scmp.eq.s32.totalorder %s18, 1
      %p35 = por %p33, %p34
      %p36 = scmp.ne.s32.totalorder %s28, %s31
      %p37 = scmp.eq.s32.totalorder %s18, 0
      %p38 = por %p36, %p37
      %p39 = scmp.ne.s32.totalorder %s28, %s31
      %p40 = scmp.eq.s32.totalorder %s23, 1
      %p41 = por %p39, %p40
      %p42 = scmp.ne.s32.totalorder %s31, %s32
      %p43 = scmp.eq.s32.totalorder %s23, 0
      %p44 = por %p42, %p43
      %p45 = scmp.ne.s32.totalorder %s31, %s32
      %p46 = scmp.eq.s32.totalorder %s24, 1
      %p47 = por %p45, %p46
      %p49 = scmp.ne.s32.totalorder %s32, %s48
      %p50 = scmp.eq.s32.totalorder %s24, 0
      %p51 = por %p49, %p50
      %s53 = sadd.s32 %s52, 1
      %p56 = scmp.eq.s32.totalorder %s18, 1
      %p57 = scmp.ne.s32.totalorder %s52, %s54
      %p58 = scmp.eq.s32.totalorder %s18, 0
      %p59 = por %p57, %p58
      %p60 = scmp.ne.s32.totalorder %s52, %s54
      %p61 = scmp.eq.s32.totalorder %s23, 1
      %p62 = por %p60, %p61
      %p63 = scmp.ne.s32.totalorder %s54, %s55
      %p64 = scmp.eq.s32.totalorder %s23, 0
      %p65 = por %p63, %p64
      %p66 = scmp.ne.s32.totalorder %s54, %s55
      %p67 = scmp.eq.s32.totalorder %s24, 1
      %p68 = por %p66, %p67
      %p70 = scmp.ne.s32.totalorder %s55, %s69
      %p71 = scmp.eq.s32.totalorder %s24, 0
      %p72 = por %p70, %p71
      %s74 = sadd.s32 %s73, 1
      %p77 = scmp.eq.s32.totalorder %s18, 1
      %p78 = scmp.ne.s32.totalorder %s73, %s75
      %p79 = scmp.eq.s32.totalorder %s18, 0
      %p80 = por %p78, %p79
      %p81 = scmp.ne.s32.totalorder %s73, %s75
      %p82 = scmp.eq.s32.totalorder %s23, 1
      %p83 = por %p81, %p82
      %p84 = scmp.ne.s32.totalorder %s75, %s76
      %p85 = scmp.eq.s32.totalorder %s23, 0
      %p86 = por %p84, %p85
      %p87 = scmp.ne.s32.totalorder %s75, %s76
      %p88 = scmp.eq.s32.totalorder %s24, 1
      %p89 = por %p87, %p88
      %p91 = scmp.ne.s32.totalorder %s76, %s90
      %p92 = scmp.eq.s32.totalorder %s24, 0
      %p93 = por %p91, %p92
      %s95 = sadd.s32 %s94, 1
      %p98 = scmp.eq.s32.totalorder %s18, 1
      %p99 = scmp.ne.s32.totalorder %s94, %s96
      %p100 = scmp.eq.s32.totalorder %s18, 0
      %p101 = por %p99, %p100
      %p102 = scmp.ne.s32.totalorder %s94, %s96
      %p103 = scmp.eq.s32.totalorder %s23, 1
      %p104 = por %p102, %p103
      %p105 = scmp.ne.s32.totalorder %s96, %s97
      %p106 = scmp.eq.s32.totalorder %s23, 0
      %p107 = por %p105, %p106
      %p108 = scmp.ne.s32.totalorder %s96, %s97
      %p109 = scmp.eq.s32.totalorder %s24, 1
      %p110 = por %p108, %p109
      %p112 = scmp.ne.s32.totalorder %s97, %s111
      %p113 = scmp.eq.s32.totalorder %s24, 0
      %p114 = por %p112, %p113
      %s116 = sadd.s32 %s115, 1
      %p119 = scmp.eq.s32.totalorder %s18, 1
      %p120 = scmp.ne.s32.totalorder %s115, %s117
      %p121 = scmp.eq.s32.totalorder %s18, 0
      %p122 = por %p120, %p121
      %p123 = scmp.ne.s32.totalorder %s115, %s117
      %p124 = scmp.eq.s32.totalorder %s23, 1
      %p125 = por %p123, %p124
      %p126 = scmp.ne.s32.totalorder %s117, %s118
      %p127 = scmp.eq.s32.totalorder %s23, 0
      %p128 = por %p126, %p127
      %p129 = scmp.ne.s32.totalorder %s117, %s118
      %p130 = scmp.eq.s32.totalorder %s24, 1
      %p131 = por %p129, %p130
      %p133 = scmp.ne.s32.totalorder %s118, %s132
      %p134 = scmp.eq.s32.totalorder %s24, 0
      %p135 = por %p133, %p134
      %s136 = ssub.s32 %s18, %s25
      %p137 = scmp.eq.s32.totalorder %s136, 0
      %s139 = sadd.s32 %s138, 1
      %s140 = scalar_select %p137, %s138, %s139
      %p143 = pneg %p137
      %p144 = scmp.eq.s32.totalorder %s18, 1
      %p145 = por %p143, %p144
      %p146 = scmp.ne.s32.totalorder %s138, %s141
      %p147 = scmp.eq.s32.totalorder %s18, 0
      %p148 = por %p146, %p147
      %p149 = scmp.ne.s32.totalorder %s138, %s141
      %p150 = scmp.eq.s32.totalorder %s23, 1
      %p151 = por %p149, %p150
      %p152 = scmp.ne.s32.totalorder %s141, %s142
      %p153 = scmp.eq.s32.totalorder %s23, 0
      %p154 = por %p152, %p153
      %p155 = scmp.ne.s32.totalorder %s141, %s142
      %p156 = scmp.eq.s32.totalorder %s24, 1
      %p157 = por %p155, %p156
      %p159 = scmp.ne.s32.totalorder %s142, %s158
      %p160 = scmp.eq.s32.totalorder %s24, 0
      %p161 = por %p159, %p160
      %p162 = scmp.le.s32.totalorder 1, %s18
      %p163 = scmp.lt.s32.totalorder %s18, 3
      %p164 = pnand %p162, %p163
      %p165 = pneg %p164
      // Predicated region
      $region9: #{tpu_custom_call.1} parent=5 // pred_check
        _
      $region10: #{tpu_custom_call.1} parent=5 // pred_check_branch
        %167 = sbr.rel (%p164) target = $region12
      $region11: #{tpu_custom_call.1} parent=5 // pred_region
        %s168 = ssub.s32 %s18, 1
        // Predicated region
        $region13: #{tpu_custom_call.1} parent=11 // pred_check
          %p169 = pneg %p65
        $region14: #{tpu_custom_call.1} parent=11 // pred_check_branch
          %171 = sbr.rel (%p169) target = $region16
        $region15: #{tpu_custom_call.1} parent=11 // pred_region
          %s173 = ssub.s32 2048, 2048
          %174 = vsyncadd [#allocation6], %s173
          %s175 = sshll.u32 [#allocation5], 4
          %s176 = int_to_ptr.vmem [resolvable:$true] %s175
          %181 = dma.hbm_to_vmem [thread:$0]  %s1, 2048, %s176, [#allocation6], 128, 128, 8
        $region16: #{tpu_custom_call.1} parent=11 // pred_fallthru
          _
        // Predicated region
        $region17: #{tpu_custom_call.1} parent=11 // pred_check
          %p182 = pneg %p86
        $region18: #{tpu_custom_call.1} parent=11 // pred_check_branch
          %184 = sbr.rel (%p182) target = $region20
        $region19: #{tpu_custom_call.1} parent=11 // pred_region
          _
        $region20: #{tpu_custom_call.1} parent=11 // pred_fallthru
          _
        // Predicated region
        $region21: #{tpu_custom_call.1} parent=11 // pred_check
          %p185 = pneg %p107
        $region22: #{tpu_custom_call.1} parent=11 // pred_check_branch
          %187 = sbr.rel (%p185) target = $region24
        $region23: #{tpu_custom_call.1} parent=11 // pred_region
          %s189 = ssub.s32 2048, 2048
          %190 = vsyncadd [#allocation6], %s189
          %s191 = sshll.u32 [#allocation7], 4
          %s192 = int_to_ptr.vmem [resolvable:$true] %s191
          %197 = dma.hbm_to_vmem [thread:$0]  %s3, 2048, %s192, [#allocation6], 128, 128, 8
        $region24: #{tpu_custom_call.1} parent=11 // pred_fallthru
          _
        // Predicated region
        $region25: #{tpu_custom_call.1} parent=11 // pred_check
          %p198 = pneg %p128
        $region26: #{tpu_custom_call.1} parent=11 // pred_check_branch
          %200 = sbr.rel (%p198) target = $region28
        $region27: #{tpu_custom_call.1} parent=11 // pred_region
          _
        $region28: #{tpu_custom_call.1} parent=11 // pred_fallthru
          _
      $region12: #{tpu_custom_call.1} parent=5 // pred_fallthru
        _
      %p201 = scmp.lt.s32.totalorder %s18, 2
      // Predicated region
      $region29: #{tpu_custom_call.1} parent=5 // pred_check
        %p202 = pneg %p201
      $region30: #{tpu_custom_call.1} parent=5 // pred_check_branch
        %204 = sbr.rel (%p202) target = $region32
      $region31: #{tpu_custom_call.1} parent=5 // pred_region
        // Predicated region
        $region33: #{tpu_custom_call.1} parent=31 // pred_check
          %p205 = pneg %p38
        $region34: #{tpu_custom_call.1} parent=31 // pred_check_branch
          %207 = sbr.rel (%p205) target = $region36
        $region35: #{tpu_custom_call.1} parent=31 // pred_region
          %s208 = sand.u32 %s28, 1
          %s209 = scalar_lea.sflag [#allocation3], %s208
          %s210 = sand.u32 %s28, 1
          %s211 = smul.addr %s210, 8
          %s212 = scalar_lea.vmem [#allocation2], %s211
          %s214 = ssub.s32 128, 128
          %215 = vsyncadd %s209, %s214
          %s216 = smul.addr %s18, 128
          %s217 = scalar_lea.hbm %s0, %s216
          %s219 = sshll.u32 %s212, 4
          %s220 = int_to_ptr.vmem [resolvable:$true] %s219
          %222 = dma.hbm_to_vmem [thread:$0]  %s217, 128, %s220, %s209
        $region36: #{tpu_custom_call.1} parent=31 // pred_fallthru
          _
      $region32: #{tpu_custom_call.1} parent=5 // pred_fallthru
        _
      %p223 = scmp.le.s32.totalorder 1, %s18
      %p224 = scmp.lt.s32.totalorder %s18, 3
      %p225 = pnand %p223, %p224
      %p226 = pneg %p225
      // Predicated region
      $region37: #{tpu_custom_call.1} parent=5 // pred_check
        _
      $region38: #{tpu_custom_call.1} parent=5 // pred_check_branch
        %228 = sbr.rel (%p225) target = $region40
      $region39: #{tpu_custom_call.1} parent=5 // pred_region
        %s229 = ssub.s32 %s18, 1
        %s230 = sand.u32 %s31, 1
        %s231 = scalar_lea.sflag [#allocation3], %s230
        %s232 = sand.u32 %s31, 1
        %s233 = smul.addr %s232, 8
        %s234 = scalar_lea.vmem [#allocation2], %s233
        // Predicated region
        $region41: #{tpu_custom_call.1} parent=39 // pred_check
          %p235 = pneg %p44
        $region42: #{tpu_custom_call.1} parent=39 // pred_check_branch
          %237 = sbr.rel (%p235) target = $region44
        $region43: #{tpu_custom_call.1} parent=39 // pred_region
          %238 = dma.done %s231, 128
        $region44: #{tpu_custom_call.1} parent=39 // pred_fallthru
          _
        // Predicated region
        $region45: #{tpu_custom_call.1} parent=39 // pred_check
          %p239 = pneg %p65
        $region46: #{tpu_custom_call.1} parent=39 // pred_check_branch
          %241 = sbr.rel (%p239) target = $region48
        $region47: #{tpu_custom_call.1} parent=39 // pred_region
          %242 = dma.done [#allocation6], 2048
        $region48: #{tpu_custom_call.1} parent=39 // pred_fallthru
          _
        // Predicated region
        $region49: #{tpu_custom_call.1} parent=39 // pred_check
          %p243 = pneg %p107
        $region50: #{tpu_custom_call.1} parent=39 // pred_check_branch
          %245 = sbr.rel (%p243) target = $region52
        $region51: #{tpu_custom_call.1} parent=39 // pred_region
          %246 = dma.done [#allocation6], 2048
        $region52: #{tpu_custom_call.1} parent=39 // pred_fallthru
          _
        %s247 = sand.u32 %s31, 1
        %s248 = scalar_lea.sflag [#allocation3], %s247
        %s249 = sand.u32 %s31, 1
        %s250 = smul.addr %s249, 8
        %s251 = scalar_lea.vmem [#allocation2], %s250
        %p252 = pneg %p44
        %p253 = pneg %p41
        %p254 = pneg %p65
        %p255 = pneg %p62
        %p256 = pneg %p86
        %p257 = pneg %p83
        %p258 = pneg %p107
        %p259 = pneg %p104
        %p260 = pneg %p128
        %p261 = pneg %p125
        %p262 = pneg %p154
        %p263 = pneg %p151
        %s264 = sand.u32 %s141, 1
        %s265 = scalar_lea.sflag [#allocation4], %s264
        %s266 = sand.u32 %s141, 1
        %s267 = smul.addr %s266, 8
        %s268 = scalar_lea.vmem [#allocation8], %s267
        %v269 = vld [vmem:[%s234] sm:$0xff]
        %v270 = vld [vmem:[#allocation5] sm:$0xff]
        %v271 = vld [vmem:[#allocation5 + $0x8] sm:$0xff]
        %v272 = vld [vmem:[#allocation5 + $0x10] sm:$0xff]
        %v273 = vld [vmem:[#allocation5 + $0x18] sm:$0xff]
        %v274 = vld [vmem:[#allocation5 + $0x20] sm:$0xff]
        %v275 = vld [vmem:[#allocation5 + $0x28] sm:$0xff]
        %v276 = vld [vmem:[#allocation5 + $0x30] sm:$0xff]
        %v277 = vld [vmem:[#allocation5 + $0x38] sm:$0xff]
        %v278 = vld [vmem:[#allocation5 + $0x40] sm:$0xff]
        %v279 = vld [vmem:[#allocation5 + $0x48] sm:$0xff]
        %v280 = vld [vmem:[#allocation5 + $0x50] sm:$0xff]
        %v281 = vld [vmem:[#allocation5 + $0x58] sm:$0xff]
        %v282 = vld [vmem:[#allocation5 + $0x60] sm:$0xff]
        %v283 = vld [vmem:[#allocation5 + $0x68] sm:$0xff]
        %v284 = vld [vmem:[#allocation5 + $0x70] sm:$0xff]
        %v285 = vld [vmem:[#allocation5 + $0x78] sm:$0xff]
        %v286 = vld [vmem:[%s2] sm:$0x1]
        %v288 = vlaneseq
        %v289 = vshrl.u32 %v288, 7
        %v290 = vsub.s32 0, %v289
        %v291 = vrot.slane %v286, %v290
        %293 = vmatprep.subr.mxu0 0.0
        %294 = vmatpush1.msra.mxu0 %v270
        %295 = vmatprep.subr.mxu0 0.0
        %296 = vmatpush1.msra.mxu0 %v271
        %297 = vmatprep.subr.mxu0 0.0
        %298 = vmatpush1.msra.mxu0 %v272
        %299 = vmatprep.subr.mxu0 0.0
        %300 = vmatpush1.msra.mxu0 %v273
        %301 = vmatprep.subr.mxu0 0.0
        %302 = vmatpush1.msra.mxu0 %v274
        %303 = vmatprep.subr.mxu0 0.0
        %304 = vmatpush1.msra.mxu0 %v275
        %305 = vmatprep.subr.mxu0 0.0
        %306 = vmatpush1.msra.mxu0 %v276
        %307 = vmatprep.subr.mxu0 0.0
        %308 = vmatpush1.msra.mxu0 %v277
        %309 = vmatprep.subr.mxu0 0.0
        %310 = vmatpush1.msra.mxu0 %v278
        %311 = vmatprep.subr.mxu0 0.0
        %312 = vmatpush1.msra.mxu0 %v279
        %313 = vmatprep.subr.mxu0 0.0
        %314 = vmatpush1.msra.mxu0 %v280
        %315 = vmatprep.subr.mxu0 0.0
        %316 = vmatpush1.msra.mxu0 %v281
        %317 = vmatprep.subr.mxu0 0.0
        %318 = vmatpush1.msra.mxu0 %v282
        %319 = vmatprep.subr.mxu0 0.0
        %320 = vmatpush1.msra.mxu0 %v283
        %321 = vmatprep.subr.mxu0 0.0
        %322 = vmatpush1.msra.mxu0 %v284
        %323 = vmatprep.subr.mxu0 0.0
        %324 = vmatpush1.msra.mxu0 %v285
        %325 = vmatprep.subr.mxu0 0.0
        %326 = vmatpush1.msra.mxu0 0.0
        %327 = vmatprep.subr.mxu0 0.0
        %328 = vmatpush1.msra.mxu0 0.0
        %329 = vmatprep.subr.mxu0 0.0
        %330 = vmatpush1.msra.mxu0 0.0
        %331 = vmatprep.subr.mxu0 0.0
        %332 = vmatpush1.msra.mxu0 0.0
        %333 = vmatprep.subr.mxu0 0.0
        %334 = vmatpush1.msra.mxu0 0.0
        %335 = vmatprep.subr.mxu0 0.0
        %336 = vmatpush1.msra.mxu0 0.0
        %337 = vmatprep.subr.mxu0 0.0
        %338 = vmatpush1.msra.mxu0 0.0
        %339 = vmatprep.subr.mxu0 0.0
        %340 = vmatpush1.msra.mxu0 0.0
        %341 = vmatprep.subr.mxu0 0.0
        %342 = vmatpush1.msra.mxu0 0.0
        %343 = vmatprep.subr.mxu0 0.0
        %344 = vmatpush1.msra.mxu0 0.0
        %345 = vmatprep.subr.mxu0 0.0
        %346 = vmatpush1.msra.mxu0 0.0
        %347 = vmatprep.subr.mxu0 0.0
        %348 = vmatpush1.msra.mxu0 0.0
        %349 = vmatprep.subr.mxu0 0.0
        %350 = vmatpush1.msra.mxu0 0.0
        %351 = vmatprep.subr.mxu0 0.0
        %352 = vmatpush1.msra.mxu0 0.0
        %353 = vmatprep.subr.mxu0 0.0
        %354 = vmatpush1.msra.mxu0 0.0
        %355 = vmatprep.subr.mxu0 0.0
        %356 = vmatpush1.msra.mxu0 0.0
        %357 = vmatprep.mubr.f32.mxu0 0.0
        %358 = vmatmul.mubr.f32.gmra.mrb[0].mxu0 %v269
        %v359 = vpop.f32.mrb[0].mxu0
        %v360 = vadd.f32 %v291, %v359
        %v361 = vpop.f32.mrb[0].mxu0
        %362 = vdwg.mxu0
        %v363 = vld [vmem:[#allocation7] sm:$0xff]
        %v364 = vld [vmem:[#allocation7 + $0x8] sm:$0xff]
        %v365 = vld [vmem:[#allocation7 + $0x10] sm:$0xff]
        %v366 = vld [vmem:[#allocation7 + $0x18] sm:$0xff]
        %v367 = vld [vmem:[#allocation7 + $0x20] sm:$0xff]
        %v368 = vld [vmem:[#allocation7 + $0x28] sm:$0xff]
        %v369 = vld [vmem:[#allocation7 + $0x30] sm:$0xff]
        %v370 = vld [vmem:[#allocation7 + $0x38] sm:$0xff]
        %v371 = vld [vmem:[#allocation7 + $0x40] sm:$0xff]
        %v372 = vld [vmem:[#allocation7 + $0x48] sm:$0xff]
        %v373 = vld [vmem:[#allocation7 + $0x50] sm:$0xff]
        %v374 = vld [vmem:[#allocation7 + $0x58] sm:$0xff]
        %v375 = vld [vmem:[#allocation7 + $0x60] sm:$0xff]
        %v376 = vld [vmem:[#allocation7 + $0x68] sm:$0xff]
        %v377 = vld [vmem:[#allocation7 + $0x70] sm:$0xff]
        %v378 = vld [vmem:[#allocation7 + $0x78] sm:$0xff]
        %v379 = vld [vmem:[%s4] sm:$0x1]
        %v381 = vlaneseq
        %v382 = vshrl.u32 %v381, 7
        %v383 = vsub.s32 0, %v382
        %v384 = vrot.slane %v379, %v383
        %386 = vmatprep.subr.mxu0 0.0
        %387 = vmatpush1.msra.mxu0 %v363
        %388 = vmatprep.subr.mxu0 0.0
        %389 = vmatpush1.msra.mxu0 %v364
        %390 = vmatprep.subr.mxu0 0.0
        %391 = vmatpush1.msra.mxu0 %v365
        %392 = vmatprep.subr.mxu0 0.0
        %393 = vmatpush1.msra.mxu0 %v366
        %394 = vmatprep.subr.mxu0 0.0
        %395 = vmatpush1.msra.mxu0 %v367
        %396 = vmatprep.subr.mxu0 0.0
        %397 = vmatpush1.msra.mxu0 %v368
        %398 = vmatprep.subr.mxu0 0.0
        %399 = vmatpush1.msra.mxu0 %v369
        %400 = vmatprep.subr.mxu0 0.0
        %401 = vmatpush1.msra.mxu0 %v370
        %402 = vmatprep.subr.mxu0 0.0
        %403 = vmatpush1.msra.mxu0 %v371
        %404 = vmatprep.subr.mxu0 0.0
        %405 = vmatpush1.msra.mxu0 %v372
        %406 = vmatprep.subr.mxu0 0.0
        %407 = vmatpush1.msra.mxu0 %v373
        %408 = vmatprep.subr.mxu0 0.0
        %409 = vmatpush1.msra.mxu0 %v374
        %410 = vmatprep.subr.mxu0 0.0
        %411 = vmatpush1.msra.mxu0 %v375
        %412 = vmatprep.subr.mxu0 0.0
        %413 = vmatpush1.msra.mxu0 %v376
        %414 = vmatprep.subr.mxu0 0.0
        %415 = vmatpush1.msra.mxu0 %v377
        %416 = vmatprep.subr.mxu0 0.0
        %417 = vmatpush1.msra.mxu0 %v378
        %418 = vmatprep.subr.mxu0 0.0
        %419 = vmatpush1.msra.mxu0 0.0
        %420 = vmatprep.subr.mxu0 0.0
        %421 = vmatpush1.msra.mxu0 0.0
        %422 = vmatprep.subr.mxu0 0.0
        %423 = vmatpush1.msra.mxu0 0.0
        %424 = vmatprep.subr.mxu0 0.0
        %425 = vmatpush1.msra.mxu0 0.0
        %426 = vmatprep.subr.mxu0 0.0
        %427 = vmatpush1.msra.mxu0 0.0
        %428 = vmatprep.subr.mxu0 0.0
        %429 = vmatpush1.msra.mxu0 0.0
        %430 = vmatprep.subr.mxu0 0.0
        %431 = vmatpush1.msra.mxu0 0.0
        %432 = vmatprep.subr.mxu0 0.0
        %433 = vmatpush1.msra.mxu0 0.0
        %434 = vmatprep.subr.mxu0 0.0
        %435 = vmatpush1.msra.mxu0 0.0
        %436 = vmatprep.subr.mxu0 0.0
        %437 = vmatpush1.msra.mxu0 0.0
        %438 = vmatprep.subr.mxu0 0.0
        %439 = vmatpush1.msra.mxu0 0.0
        %440 = vmatprep.subr.mxu0 0.0
        %441 = vmatpush1.msra.mxu0 0.0
        %442 = vmatprep.subr.mxu0 0.0
        %443 = vmatpush1.msra.mxu0 0.0
        %444 = vmatprep.subr.mxu0 0.0
        %445 = vmatpush1.msra.mxu0 0.0
        %446 = vmatprep.subr.mxu0 0.0
        %447 = vmatpush1.msra.mxu0 0.0
        %448 = vmatprep.subr.mxu0 0.0
        %449 = vmatpush1.msra.mxu0 0.0
        %450 = vmatprep.mubr.f32.mxu0 0.0
        %451 = vmatmul.mubr.f32.gmra.mrb[0].mxu0 %v360
        %v452 = vpop.f32.mrb[0].mxu0
        %v453 = vadd.f32 %v384, %v452
        %v454 = vpop.f32.mrb[0].mxu0
        %455 = vdwg.mxu0
        %456 = vst [vmem:[%s268] sm:$0xff] %v453
        %s457 = sand.u32 %s141, 1
        %s458 = scalar_lea.sflag [#allocation4], %s457
        %s459 = sand.u32 %s141, 1
        %s460 = smul.addr %s459, 8
        %s461 = scalar_lea.vmem [#allocation8], %s460
        // Predicated region
        $region53: #{tpu_custom_call.1} parent=39 // pred_check
          %p462 = pneg %p151
        $region54: #{tpu_custom_call.1} parent=39 // pred_check_branch
          %464 = sbr.rel (%p462) target = $region56
        $region55: #{tpu_custom_call.1} parent=39 // pred_region
          %s466 = ssub.s32 128, 128
          %467 = vsyncadd %s458, %s466
          %s468 = smul.addr %s23, 128
          %s469 = scalar_lea.hbm %s5, %s468
          %s471 = sshll.u32 %s461, 4
          %s472 = int_to_ptr.vmem [resolvable:$true] %s471
          %474 = dma.vmem_to_hbm [thread:$0]  %s472, 128, %s469, %s458
        $region56: #{tpu_custom_call.1} parent=39 // pred_fallthru
          _
      $region40: #{tpu_custom_call.1} parent=5 // pred_fallthru
        _
      %p475 = scmp.le.s32.totalorder 2, %s18
      // Predicated region
      $region57: #{tpu_custom_call.1} parent=5 // pred_check
        %p476 = pneg %p475
      $region58: #{tpu_custom_call.1} parent=5 // pred_check_branch
        %478 = sbr.rel (%p476) target = $region60
      $region59: #{tpu_custom_call.1} parent=5 // pred_region
        %s479 = ssub.s32 %s18, 2
        // Predicated region
        $region61: #{tpu_custom_call.1} parent=59 // pred_check
          %p480 = pneg %p157
        $region62: #{tpu_custom_call.1} parent=59 // pred_check_branch
          %482 = sbr.rel (%p480) target = $region64
        $region63: #{tpu_custom_call.1} parent=59 // pred_region
          %s483 = sand.u32 %s142, 1
          %s484 = scalar_lea.sflag [#allocation4], %s483
          %s485 = sand.u32 %s142, 1
          %s486 = smul.addr %s485, 8
          %s487 = scalar_lea.vmem [#allocation8], %s486
          %488 = dma.done %s484, 128
        $region64: #{tpu_custom_call.1} parent=59 // pred_fallthru
          _
      $region60: #{tpu_custom_call.1} parent=5 // pred_fallthru
        _
    $region6: #{tpu_custom_call.1} parent=1 // loop_footer
      %s22 = sadd.s32 1, %s18
    $region7: #{tpu_custom_call.1} parent=1 // loop_footer_branch
      %17 = sbr.rel target = $region3
    $region8: #{tpu_custom_call.1} parent=1 // loop_exit
      _
    %489 = vsyncpa [#allocation3], 1
    %s490 = scalar_lea.sflag [#allocation3], 1
    %491 = vsyncpa %s490, 1
    %492 = vsyncpa [#allocation6], 1
    %493 = vsyncpa [#allocation4], 1
    %s494 = scalar_lea.sflag [#allocation4], 1
    %495 = vsyncpa %s494, 1

</llo_original>
